<compile_context>
chip_gen: v5e
topology: v5e:2x2
jax: 0.10.0
libtpu: 0.0.40
codegen_flags: <defaults>
</compile_context>

<pallas_src>
import math

import jax
import jax.numpy as jnp
from jax.experimental import pallas as pl
from jax.experimental.pallas import tpu as pltpu

_MiB = 1024 * 1024


def _noisy_linear_kernel(x_ref, ein_ref, wmu_ref, wsig_ref, rows_ref, o_ref):
    """One lane-dense output tile: y = x@Wmu^T + ((x*eps_in)@Wsig^T)*eps_out + b_eff."""
    x = x_ref[...]                                   # [B, I]   (resident)
    # Fold the rank-1 noise into the activations; W_eps / W_eff are never formed.
    x_noisy = x * ein_ref[...]                       # [B, I] * [1, I] (VPU, tiny)

    y_mu = jnp.dot(x, wmu_ref[...], preferred_element_type=jnp.float32)         # MXU
    y_sig = jnp.dot(x_noisy, wsig_ref[...], preferred_element_type=jnp.float32)  # MXU

    eps_out = rows_ref[0:1, :]                       # [1, TO]
    b_mu = rows_ref[1:2, :]                          # [1, TO]
    b_sig = rows_ref[2:3, :]                         # [1, TO]

    y = y_mu + y_sig * eps_out + b_mu + b_sig * eps_out
    o_ref[...] = y.astype(o_ref.dtype)


def _vmem_bytes(B, I, TO, itemsize):
    """Double-buffered VMEM footprint of one grid step."""
    x_b = B * I * itemsize                  # resident activations
    ein_b = I * itemsize                    # eps_in row
    w_b = 2 * 2 * I * TO * itemsize         # 2 weight inputs x 2 buffers
    rows_b = 2 * 3 * TO * 4                 # packed eps_out/bias rows (f32)
    out_b = 2 * B * TO * itemsize           # double-buffered output tile
    return x_b + ein_b + w_b + rows_b + out_b


def prepare_noisy_linear(weight_mu, weight_sigma, eps_in, eps_out,
                         bias_mu, bias_sigma, *, tile_o=None,
                         weights_dtype=None, batch_hint=256):
    """One-time layout change (hoisted out of the per-call path).

    weight_mu / weight_sigma are in PyTorch convention [out_features, in_features].
    Returns a dict of pre-transposed / padded device arrays + tiling metadata.
    """
    O, I = weight_mu.shape
    weights_dtype = weights_dtype or weight_mu.dtype
    itemsize = jnp.dtype(weights_dtype).itemsize

    # Generation-aware VMEM budget (v7x: 64 MiB/TC, v5e/v6e: 128 MiB).
    try:
        vmem_cap = getattr(pltpu.get_tpu_info(), "vmem_capacity_bytes", 64 * _MiB)
    except Exception:
        vmem_cap = 64 * _MiB
    vmem_budget = int(vmem_cap * 3 // 4)     # leave headroom for compiler scratch

    # --- adaptive lane-dense output tile (multiple of 128) -------------------
    o128 = pl.cdiv(O, 128) * 128
    if tile_o is not None:
        TO = int(min(max(128, pl.cdiv(tile_o, 128) * 128), o128))
    else:
        # target ~4 MiB of streamed weight bytes (Wmu + Wsig) per grid step
        target = 4 * _MiB
        TO = (target // max(1, 2 * I * itemsize)) // 128 * 128
        TO = int(min(max(TO, 128), o128, 2048))
    # v7x: keep >= 2 O-steps when possible so the "parallel" axis feeds both TCs.
    if o128 >= 256 and o128 // TO < 2:
        TO = max(128, (o128 // 2) // 128 * 128)
    # shrink until the double-buffered footprint fits the VMEM budget
    while TO > 128 and _vmem_bytes(batch_hint, I, TO, itemsize) > vmem_budget:
        TO -= 128
    # TODO(synk): add a K (in_features) grid axis with an f32 VMEM accumulator
    # if B*I or I*TO alone ever exceeds the VMEM budget.

    O_pad = pl.cdiv(O, TO) * TO
    pad_o = O_pad - O

    wmu_t = jnp.pad(weight_mu, ((0, pad_o), (0, 0))).T.astype(weights_dtype)   # [I, O_pad]
    wsig_t = jnp.pad(weight_sigma, ((0, pad_o), (0, 0))).T.astype(weights_dtype)
    ein_row = eps_in.reshape(1, I).astype(weights_dtype)                        # [1, I]
    rows = jnp.stack([                                                          # [3, O_pad] f32
        jnp.pad(eps_out, (0, pad_o)),
        jnp.pad(bias_mu, (0, pad_o)),
        jnp.pad(bias_sigma, (0, pad_o)),
    ]).astype(jnp.float32)

    return dict(wmu_t=wmu_t, wsig_t=wsig_t, ein_row=ein_row, rows=rows,
                out_features=O, O_pad=O_pad, TO=TO, vmem_budget=vmem_budget)


def noisy_linear_apply(x, params):
    """y = x @ (W_mu + W_sigma * outer(eps_out, eps_in)).T + (b_mu + b_sigma * eps_out)."""
    B, I = x.shape
    O = params["out_features"]
    O_pad = params["O_pad"]
    TO = params["TO"]
    wmu_t, wsig_t = params["wmu_t"], params["wsig_t"]
    ein_row, rows = params["ein_row"], params["rows"]

    w_item = jnp.dtype(wmu_t.dtype).itemsize
    x_item = jnp.dtype(x.dtype).itemsize

    needed = _vmem_bytes(B, I, TO, max(w_item, x_item))
    vmem_limit = int(min(max(needed + 4 * _MiB, 16 * _MiB), params["vmem_budget"]))

    cost = pl.CostEstimate(
        flops=4 * B * O_pad * I,                         # two dots
        transcendentals=0,
        bytes_accessed=(2 * O_pad * I) * w_item
                       + (B * I + B * O_pad) * x_item
                       + (3 * O_pad + I) * 4,
    )

    grid = (O_pad // TO,)

    out = pl.pallas_call(
        _noisy_linear_kernel,
        out_shape=jax.ShapeDtypeStruct((B, O_pad), x.dtype),
        grid_spec=pltpu.PrefetchScalarGridSpec(
            num_scalar_prefetch=0,
            grid=grid,
            in_specs=[
                pl.BlockSpec((B, I), lambda o: (0, 0)),    # x (resident)
                pl.BlockSpec((1, I), lambda o: (0, 0)),    # eps_in row (resident)
                pl.BlockSpec((I, TO), lambda o: (0, o)),   # W_mu^T tile (streamed)
                pl.BlockSpec((I, TO), lambda o: (0, o)),   # W_sigma^T tile (streamed)
                pl.BlockSpec((3, TO), lambda o: (0, o)),   # [eps_out; b_mu; b_sig] tile
            ],
            out_specs=pl.BlockSpec((B, TO), lambda o: (0, o)),
        ),
        compiler_params=pltpu.CompilerParams(
            dimension_semantics=("parallel",),
            vmem_limit_bytes=vmem_limit,
        ),
        cost_estimate=cost,
    )(x, ein_row, wmu_t, wsig_t, rows)

    return out[:, :O]


def scale_noise(key, size):
    """Factorized gaussian noise: sign(x) * sqrt(|x|) with x ~ N(0,1)."""
    x = jax.random.normal(key, (size,), dtype=jnp.float32)
    return jnp.sign(x) * jnp.sqrt(jnp.abs(x))


def init_noisy_linear(key, in_features, out_features, std_init=0.5):
    """Mirrors NoisyLinear.reset_parameters() + reset_noise() (factorized form)."""
    k_wmu, k_bmu, k_ein, k_eout = jax.random.split(key, 4)
    mu_range = 1.0 / math.sqrt(in_features)

    weight_mu = jax.random.uniform(
        k_wmu, (out_features, in_features), jnp.float32, -mu_range, mu_range)
    weight_sigma = jnp.full((out_features, in_features),
                            std_init / math.sqrt(in_features), jnp.float32)
    bias_mu = jax.random.uniform(
        k_bmu, (out_features,), jnp.float32, -mu_range, mu_range)
    bias_sigma = jnp.full((out_features,),
                          std_init / math.sqrt(out_features), jnp.float32)

    eps_in = scale_noise(k_ein, in_features)     # factors only; outer() never formed
    eps_out = scale_noise(k_eout, out_features)  # also serves as bias_epsilon

    return (weight_mu, weight_sigma, eps_in, eps_out, bias_mu, bias_sigma)


if __name__ == "__main__":
    key = jax.random.PRNGKey(0)
    k_param, k_x = jax.random.split(key)

    B, IN, OUT = 8, 32, 64
    raw_params = init_noisy_linear(k_param, IN, OUT, std_init=0.5)
    x = jax.random.normal(k_x, (B, IN), dtype=jnp.float32)

    # One-time layout change at "init" time (not on the per-call path).
    prepared = prepare_noisy_linear(*raw_params, batch_hint=B)

    y = noisy_linear_apply(x, prepared)
    jax.block_until_ready(y)

    # Reference check in plain JAX (materializes the full outer product).
    wmu, wsig, eps_in, eps_out, bmu, bsig = raw_params
    w_eps = jnp.outer(eps_out, eps_in)
    y_ref = x @ (wmu + wsig * w_eps).T + (bmu + bsig * eps_out)

    assert y.shape == (B, OUT)
    assert jnp.allclose(y, y_ref, atol=1e-5, rtol=1e-5)

    print("KERNEL_OK")
</pallas_src>

<mosaic_0001>
module attributes {stable_mosaic.version = 11 : i64} {
  func.func @_noisy_linear_kernel(%arg0: i32, %arg1: memref<8x32xf32, #tpu.memory_space<vmem>>, %arg2: memref<1x32xf32, #tpu.memory_space<vmem>>, %arg3: memref<32x128xf32, #tpu.memory_space<vmem>>, %arg4: memref<32x128xf32, #tpu.memory_space<vmem>>, %arg5: memref<3x128xf32, #tpu.memory_space<vmem>>, %arg6: memref<8x128xf32, #tpu.memory_space<vmem>>) attributes {dimension_semantics = [#tpu.dimension_semantics<parallel>], iteration_bounds = array<i64: 1>, scalar_prefetch = 0 : i64, scratch_operands = 0 : i64, tpu.core_type = #tpu.core_type<tc>, window_params = [{pipeline_mode = #tpu.pipeline_mode<synchronous>, transform_indices = @transform_0, window_bounds = array<i64: 8, 32>}, {pipeline_mode = #tpu.pipeline_mode<synchronous>, transform_indices = @transform_1, window_bounds = array<i64: 1, 32>}, {transform_indices = @transform_2, window_bounds = array<i64: 32, 128>}, {transform_indices = @transform_3, window_bounds = array<i64: 32, 128>}, {transform_indices = @transform_4, window_bounds = array<i64: 3, 128>}, {transform_indices = @transform_5, window_bounds = array<i64: 8, 128>}]} {
    %c0 = arith.constant 0 : index
    %c0_0 = arith.constant 0 : index
    %0 = vector.load %arg1[%c0, %c0_0] : memref<8x32xf32, #tpu.memory_space<vmem>>, vector<8x32xf32>
    %c0_1 = arith.constant 0 : index
    %c0_2 = arith.constant 0 : index
    %1 = vector.load %arg2[%c0_1, %c0_2] : memref<1x32xf32, #tpu.memory_space<vmem>>, vector<1x32xf32>
    %2 = vector.broadcast %1 : vector<1x32xf32> to vector<8x32xf32>
    %3 = arith.mulf %0, %2 : vector<8x32xf32>
    %c0_3 = arith.constant 0 : index
    %c0_4 = arith.constant 0 : index
    %4 = vector.load %arg3[%c0_3, %c0_4] : memref<32x128xf32, #tpu.memory_space<vmem>>, vector<32x128xf32>
    %cst = arith.constant dense<0.000000e+00> : vector<8x128xf32>
    %5 = tpu.matmul %0, %4, %cst {dimension_numbers = #tpu.dot_dimension_numbers<[1], [0], [0], [1], [0, 0, 1, 1], [], []>} : vector<8x32xf32>, vector<32x128xf32>, vector<8x128xf32> -> vector<8x128xf32>
    %c0_5 = arith.constant 0 : index
    %c0_6 = arith.constant 0 : index
    %6 = vector.load %arg4[%c0_5, %c0_6] : memref<32x128xf32, #tpu.memory_space<vmem>>, vector<32x128xf32>
    %cst_7 = arith.constant dense<0.000000e+00> : vector<8x128xf32>
    %7 = tpu.matmul %3, %6, %cst_7 {dimension_numbers = #tpu.dot_dimension_numbers<[1], [0], [0], [1], [0, 0, 1, 1], [], []>} : vector<8x32xf32>, vector<32x128xf32>, vector<8x128xf32> -> vector<8x128xf32>
    %c0_8 = arith.constant 0 : index
    %c0_9 = arith.constant 0 : index
    %8 = vector.load %arg5[%c0_8, %c0_9] : memref<3x128xf32, #tpu.memory_space<vmem>>, vector<1x128xf32>
    %c1 = arith.constant 1 : index
    %c0_10 = arith.constant 0 : index
    %9 = vector.load %arg5[%c1, %c0_10] : memref<3x128xf32, #tpu.memory_space<vmem>>, vector<1x128xf32>
    %c2 = arith.constant 2 : index
    %c0_11 = arith.constant 0 : index
    %10 = vector.load %arg5[%c2, %c0_11] : memref<3x128xf32, #tpu.memory_space<vmem>>, vector<1x128xf32>
    %11 = vector.broadcast %8 : vector<1x128xf32> to vector<8x128xf32>
    %12 = arith.mulf %7, %11 : vector<8x128xf32>
    %13 = arith.addf %5, %12 : vector<8x128xf32>
    %14 = vector.broadcast %9 : vector<1x128xf32> to vector<8x128xf32>
    %15 = arith.addf %13, %14 : vector<8x128xf32>
    %16 = arith.mulf %10, %8 : vector<1x128xf32>
    %17 = vector.broadcast %16 : vector<1x128xf32> to vector<8x128xf32>
    %18 = arith.addf %15, %17 : vector<8x128xf32>
    %c0_12 = arith.constant 0 : index
    %c0_13 = arith.constant 0 : index
    %19 = vector.load %arg6[%c0_12, %c0_13] : memref<8x128xf32, #tpu.memory_space<vmem>>, vector<8x128xf32>
    tpu.vector_store %arg6[%c0_12, %c0_13], %18 {strides = array<i32>} : memref<8x128xf32, #tpu.memory_space<vmem>>, vector<8x128xf32>,
    return
  }
  func.func @transform_0(%arg0: i32) -> (i32, i32) {
    %c0_i32 = arith.constant 0 : i32
    %c0_i32_0 = arith.constant 0 : i32
    %c0_i32_1 = arith.constant 0 : i32
    return %c0_i32, %c0_i32_0 : i32, i32
  }
  func.func @transform_1(%arg0: i32) -> (i32, i32) {
    %c0_i32 = arith.constant 0 : i32
    %c0_i32_0 = arith.constant 0 : i32
    %c0_i32_1 = arith.constant 0 : i32
    return %c0_i32, %c0_i32_0 : i32, i32
  }
  func.func @transform_2(%arg0: i32) -> (i32, i32) {
    %c0_i32 = arith.constant 0 : i32
    %c0_i32_0 = arith.constant 0 : i32
    return %c0_i32, %arg0 : i32, i32
  }
  func.func @transform_3(%arg0: i32) -> (i32, i32) {
    %c0_i32 = arith.constant 0 : i32
    %c0_i32_0 = arith.constant 0 : i32
    return %c0_i32, %arg0 : i32, i32
  }
  func.func @transform_4(%arg0: i32) -> (i32, i32) {
    %c0_i32 = arith.constant 0 : i32
    %c0_i32_0 = arith.constant 0 : i32
    return %c0_i32, %arg0 : i32, i32
  }
  func.func @transform_5(%arg0: i32) -> (i32, i32) {
    %c0_i32 = arith.constant 0 : i32
    %c0_i32_0 = arith.constant 0 : i32
    return %c0_i32, %arg0 : i32, i32
  }
}

</mosaic_0001>

<llo_original>
// kernel: tpu_custom_call.1
$region0: #{tpu_custom_call.1}
  #allocation0 [shape = 'u32[]', space=smem, size = 0x4, offset = 0x4, fixed_abs, tag = 'smem constant byte address 0x4 - core index']
  #allocation1 [shape = 'u32[72,128]{1,0:T(1,128)}', space=vmem, size = 0x9000, scoped, tag = 'internal scratch']
  %s0 = inlined_call_operand.hbm [shape: f32[8,32], index: 0, kind: input, shape index: {}]
  %s1 = inlined_call_operand.hbm [shape: f32[1,32], index: 1, kind: input, shape index: {}]
  %s2 = inlined_call_operand.hbm [shape: f32[32,128], index: 2, kind: input, shape index: {}]
  %s3 = inlined_call_operand.hbm [shape: f32[32,128], index: 3, kind: input, shape index: {}]
  %s4 = inlined_call_operand.hbm [shape: f32[3,128], index: 4, kind: input, shape index: {}]
  %s5 = inlined_call_operand.hbm [shape: f32[8,128], index: 5, kind: output, shape index: {}]
  %s6 = sld [smem:[#allocation0]]
  $region50: #{tpu_custom_call.1} parent=0
    _
  %s8 = ssub.s32 1, %s6
  %s9 = scalar_select 0, %s8, %s6
  $region1: #{tpu_custom_call.1} parent=0
    #allocation2 [shape = 'u8[4096]{0}', space=vmem, size = 0x1000, scoped, tag = 'input window, operand 0, single buffered']
    #allocation3 [shape = 's32[1]{0}', space=sflag, size = 0x4, scoped, tag = 'scoped memory for tpu_custom_call.1']
    #allocation4 [shape = 's32[1]{0}', space=sflag, size = 0x4, scoped, tag = 'scoped memory for tpu_custom_call.1']
    #allocation5 [shape = 'u8[512]{0}', space=vmem, size = 0x400, scoped, tag = 'input window, operand 1, single buffered']
    #allocation6 [shape = 's32[1]{0}', space=sflag, size = 0x4, scoped, tag = 'scoped memory for tpu_custom_call.1']
    #allocation7 [shape = 'u8[16384]{0}', space=vmem, size = 0x4000, scoped, tag = 'input window, operand 2, single buffered']
    #allocation8 [shape = 'u8[16384]{0}', space=vmem, size = 0x4000, scoped, tag = 'input window, operand 3, single buffered']
    #allocation9 [shape = 's32[1]{0}', space=sflag, size = 0x4, scoped, tag = 'scoped memory for tpu_custom_call.1']
    #allocation10 [shape = 'u8[2048]{0}', space=vmem, size = 0x800, scoped, tag = 'input window, operand 4, single buffered']
    #allocation11 [shape = 'u8[4096]{0}', space=vmem, size = 0x1000, scoped, tag = 'output window, operand 0, single buffered']
    %10 = vsyncpa [#allocation3], 0
    %11 = vsyncpa [#allocation6], 0
    %12 = vsyncpa [#allocation9], 0
    %13 = vsyncpa [#allocation4], 0
    // Predicated region
    $region2: #{tpu_custom_call.1} parent=1 // pred_check
      _
    $region3: #{tpu_custom_call.1} parent=1 // pred_check_branch
      %15 = sbr.rel (0) target = $region5
    $region4: #{tpu_custom_call.1} parent=1 // pred_region
      %17 = vsyncadd [#allocation3], 0
      %s19 = sshll.u32 %s0, 4
      %s20 = int_to_ptr.hbm [resolvable:$true] %s19
      %s21 = sshll.u32 [#allocation2], 4
      %s22 = int_to_ptr.vmem [resolvable:$true] %s21
      %24 = dma.hbm_to_vmem [thread:$0]  %s20, 128, %s22, [#allocation3]
    $region5: #{tpu_custom_call.1} parent=1 // pred_fallthru
      _
    // Predicated region
    $region6: #{tpu_custom_call.1} parent=1 // pred_check
      _
    $region7: #{tpu_custom_call.1} parent=1 // pred_check_branch
      %26 = sbr.rel (0) target = $region9
    $region8: #{tpu_custom_call.1} parent=1 // pred_region
      %28 = vsyncadd [#allocation6], 0
      %s30 = sshll.u32 %s1, 4
      %s31 = int_to_ptr.hbm [resolvable:$true] %s30
      %s32 = sshll.u32 [#allocation5], 4
      %s33 = int_to_ptr.vmem [resolvable:$true] %s32
      %35 = dma.hbm_to_vmem [thread:$0]  %s31, 16, %s33, [#allocation6]
    $region9: #{tpu_custom_call.1} parent=1 // pred_fallthru
      _
    // Predicated region
    $region10: #{tpu_custom_call.1} parent=1 // pred_check
      _
    $region11: #{tpu_custom_call.1} parent=1 // pred_check_branch
      %37 = sbr.rel (0) target = $region13
    $region12: #{tpu_custom_call.1} parent=1 // pred_region
      %39 = vsyncadd [#allocation6], 0
      %s40 = sshll.u32 %s2, 4
      %s41 = int_to_ptr.hbm [resolvable:$true] %s40
      %s42 = sshll.u32 [#allocation7], 4
      %s43 = int_to_ptr.vmem [resolvable:$true] %s42
      %48 = dma.hbm_to_vmem [thread:$0]  %s41, 512, %s43, [#allocation6], 128, 128, 8
    $region13: #{tpu_custom_call.1} parent=1 // pred_fallthru
      _
    // Predicated region
    $region14: #{tpu_custom_call.1} parent=1 // pred_check
      _
    $region15: #{tpu_custom_call.1} parent=1 // pred_check_branch
      %50 = sbr.rel (0) target = $region17
    $region16: #{tpu_custom_call.1} parent=1 // pred_region
      %52 = vsyncadd [#allocation9], 0
      %s53 = sshll.u32 %s3, 4
      %s54 = int_to_ptr.hbm [resolvable:$true] %s53
      %s55 = sshll.u32 [#allocation8], 4
      %s56 = int_to_ptr.vmem [resolvable:$true] %s55
      %61 = dma.hbm_to_vmem [thread:$0]  %s54, 512, %s56, [#allocation9], 128, 128, 8
    $region17: #{tpu_custom_call.1} parent=1 // pred_fallthru
      _
    // Predicated region
    $region18: #{tpu_custom_call.1} parent=1 // pred_check
      _
    $region19: #{tpu_custom_call.1} parent=1 // pred_check_branch
      %63 = sbr.rel (0) target = $region21
    $region20: #{tpu_custom_call.1} parent=1 // pred_region
      %65 = vsyncadd [#allocation9], 0
      %s67 = sshll.u32 %s4, 4
      %s68 = int_to_ptr.hbm [resolvable:$true] %s67
      %s69 = sshll.u32 [#allocation10], 4
      %s70 = int_to_ptr.vmem [resolvable:$true] %s69
      %72 = dma.hbm_to_vmem [thread:$0]  %s68, 64, %s70, [#allocation9]
    $region21: #{tpu_custom_call.1} parent=1 // pred_fallthru
      _
    // Predicated region
    $region22: #{tpu_custom_call.1} parent=1 // pred_check
      _
    $region23: #{tpu_custom_call.1} parent=1 // pred_check_branch
      %74 = sbr.rel (0) target = $region25
    $region24: #{tpu_custom_call.1} parent=1 // pred_region
      %76 = dma.done [#allocation3], 128
    $region25: #{tpu_custom_call.1} parent=1 // pred_fallthru
      _
    // Predicated region
    $region26: #{tpu_custom_call.1} parent=1 // pred_check
      _
    $region27: #{tpu_custom_call.1} parent=1 // pred_check_branch
      %78 = sbr.rel (0) target = $region29
    $region28: #{tpu_custom_call.1} parent=1 // pred_region
      %80 = dma.done [#allocation6], 16
    $region29: #{tpu_custom_call.1} parent=1 // pred_fallthru
      _
    // Predicated region
    $region30: #{tpu_custom_call.1} parent=1 // pred_check
      _
    $region31: #{tpu_custom_call.1} parent=1 // pred_check_branch
      %82 = sbr.rel (0) target = $region33
    $region32: #{tpu_custom_call.1} parent=1 // pred_region
      %84 = dma.done [#allocation6], 512
    $region33: #{tpu_custom_call.1} parent=1 // pred_fallthru
      _
    // Predicated region
    $region34: #{tpu_custom_call.1} parent=1 // pred_check
      _
    $region35: #{tpu_custom_call.1} parent=1 // pred_check_branch
      %86 = sbr.rel (0) target = $region37
    $region36: #{tpu_custom_call.1} parent=1 // pred_region
      %88 = dma.done [#allocation9], 512
    $region37: #{tpu_custom_call.1} parent=1 // pred_fallthru
      _
    // Predicated region
    $region38: #{tpu_custom_call.1} parent=1 // pred_check
      _
    $region39: #{tpu_custom_call.1} parent=1 // pred_check_branch
      %90 = sbr.rel (0) target = $region41
    $region40: #{tpu_custom_call.1} parent=1 // pred_region
      %92 = dma.done [#allocation9], 64
    $region41: #{tpu_custom_call.1} parent=1 // pred_fallthru
      _
    %v93 = vld [vmem:[#allocation2] sm:$0xff]
    %v94 = vld [vmem:[#allocation5] sm:$0x1]
    %v96 = vperm.slane %v94, 0
    %v98 = vmul.f32 %v93, %v96
    %v99 = vld [vmem:[#allocation7] sm:$0xff]
    %v100 = vld [vmem:[#allocation7 + $0x8] sm:$0xff]
    %v101 = vld [vmem:[#allocation7 + $0x10] sm:$0xff]
    %v102 = vld [vmem:[#allocation7 + $0x18] sm:$0xff]
    %v103 = vld [vmem:[#allocation8] sm:$0xff]
    %v104 = vld [vmem:[#allocation8 + $0x8] sm:$0xff]
    %v105 = vld [vmem:[#allocation8 + $0x10] sm:$0xff]
    %v106 = vld [vmem:[#allocation8 + $0x18] sm:$0xff]
    %vm107 = vcmask 261120
    %v109 = vsel %vm107, %v98, 0
    %111 = vmatpush.msra.mxu0 0.0
    %112 = vmatpush.msra.mxu0 0.0
    %113 = vmatpush.msra.mxu0 0.0
    %114 = vmatpush.msra.mxu0 0.0
    %115 = vmatpush.msra.mxu0 0.0
    %116 = vmatpush.msra.mxu0 0.0
    %117 = vmatpush.msra.mxu0 0.0
    %118 = vmatpush.msra.mxu0 0.0
    %119 = vmatpush.msra.mxu0 0.0
    %120 = vmatpush.msra.mxu0 0.0
    %121 = vmatpush.msra.mxu0 0.0
    %122 = vmatpush.msra.mxu0 0.0
    %123 = vmatpush.msra.mxu0 %v106
    %124 = vmatpush.msra.mxu0 %v105
    %125 = vmatpush.msra.mxu0 %v104
    %126 = vmatpush.msra.mxu0 %v103
    %127 = vmatmul.f32.gmra.mxu0 %v109
    %v128 = vpop.f32.mrf.mxu0
    %v129 = vadd.f32 0.0, %v128
    %130 = vdwg.mxu0
    %v131 = vld [vmem:[#allocation10] sm:$0x1]
    %v132 = vld [vmem:[#allocation10 + $0x1] sm:$0x1]
    %v133 = vld [vmem:[#allocation10 + $0x2] sm:$0x1]
    %v134 = vperm.slane %v131, 0
    %v135 = vmul.f32 %v129, %v134
    %v137 = vsel %vm107, %v93, 0
    %139 = vmatpush.msra.mxu0 0.0
    %140 = vmatpush.msra.mxu0 0.0
    %141 = vmatpush.msra.mxu0 0.0
    %142 = vmatpush.msra.mxu0 0.0
    %143 = vmatpush.msra.mxu0 0.0
    %144 = vmatpush.msra.mxu0 0.0
    %145 = vmatpush.msra.mxu0 0.0
    %146 = vmatpush.msra.mxu0 0.0
    %147 = vmatpush.msra.mxu0 0.0
    %148 = vmatpush.msra.mxu0 0.0
    %149 = vmatpush.msra.mxu0 0.0
    %150 = vmatpush.msra.mxu0 0.0
    %151 = vmatpush.msra.mxu0 %v102
    %152 = vmatpush.msra.mxu0 %v101
    %153 = vmatpush.msra.mxu0 %v100
    %154 = vmatpush.msra.mxu0 %v99
    %155 = vmatmul.f32.gmra.mxu0 %v137
    %v156 = vpop.f32.mrf.mxu0
    %v157 = vadd.f32 %v135, %v156
    %158 = vdwg.mxu0
    %v159 = vperm.slane %v132, 0
    %v160 = vadd.f32 %v157, %v159
    %v161 = vmul.f32 %v133, %v131
    %v162 = vperm.slane %v161, 0
    %v163 = vadd.f32 %v160, %v162
    %164 = vst [vmem:[#allocation11] sm:$0xff] %v163
    // Predicated region
    $region42: #{tpu_custom_call.1} parent=1 // pred_check
      _
    $region43: #{tpu_custom_call.1} parent=1 // pred_check_branch
      %166 = sbr.rel (0) target = $region45
    $region44: #{tpu_custom_call.1} parent=1 // pred_region
      %168 = vsyncadd [#allocation4], 0
      %s170 = sshll.u32 [#allocation11], 4
      %s171 = int_to_ptr.vmem [resolvable:$true] %s170
      %s172 = sshll.u32 %s5, 4
      %s173 = int_to_ptr.hbm [resolvable:$true] %s172
      %175 = dma.vmem_to_hbm [thread:$0]  %s171, 128, %s173, [#allocation4]
    $region45: #{tpu_custom_call.1} parent=1 // pred_fallthru
      _
    // Predicated region
    $region46: #{tpu_custom_call.1} parent=1 // pred_check
      _
    $region47: #{tpu_custom_call.1} parent=1 // pred_check_branch
      %177 = sbr.rel (0) target = $region49
    $region48: #{tpu_custom_call.1} parent=1 // pred_region
      %179 = dma.done [#allocation4], 128
    $region49: #{tpu_custom_call.1} parent=1 // pred_fallthru
      _
    %180 = vsyncpa [#allocation3], 1
    %181 = vsyncpa [#allocation6], 1
    %182 = vsyncpa [#allocation9], 1
    %183 = vsyncpa [#allocation4], 1

</llo_original>
